<compile_context>
chip_gen: v7x
topology: tpu7x:2x2x1
jax: 0.10.0
libtpu: 0.0.40
codegen_flags: <defaults>
</compile_context>

<pallas_src>
import jax
import jax.numpy as jnp
from jax.experimental import pallas as pl
from jax.experimental.pallas import tpu as pltpu

_LANES = 128
_SUBLANES = 8
_MIN_STEPS = 8                 # target grid steps for pipelining / megacore
_MIN_BLOCK_BYTES = 1 << 20     # don't shrink blocks below ~1 MiB for steps
_VMEM_LIMIT_CAP = 48 << 20     # stays under v7x's 64 MiB physical VMEM

_budget_cache = None


def _tile_budget_bytes():
    """Per-buffer block budget, gated by TPU generation."""
    global _budget_cache
    if _budget_cache is None:
        try:
            kind = jax.devices()[0].device_kind.lower()
        except Exception:
            kind = ""
        if ("v6" in kind) or ("v7" in kind) or ("tpu7" in kind):
            _budget_cache = 4 << 20   # v6e / v7x: bigger blocks, fewer steps
        else:
            _budget_cache = 2 << 20   # v5e & unknown: conservative, roofline-ok
    return _budget_cache


def _cdiv(a, b):
    return -(-a // b)


def _round_up(x, m):
    return _cdiv(x, m) * m


def _prod(shape):
    n = 1
    for d in shape:
        n *= int(d)
    return n


# ---------------------------------------------------------------------------
# Kernels
# ---------------------------------------------------------------------------

def _sub_kernel(x_ref, y_ref, o_ref):
    # Elementwise subtract; size-1 dims of either operand broadcast on the VPU.
    # Mixed input dtypes are promoted here (hidden under the DMA).
    o_ref[...] = (x_ref[...] - y_ref[...]).astype(o_ref.dtype)


def _dual_sub_kernel(xl_ref, yu_ref, xu_ref, yl_ref, lo_ref, hi_ref):
    # Fused interval propagation: lower = xL - yU, upper = xU - yL.
    lo_ref[...] = (xl_ref[...] - yu_ref[...]).astype(lo_ref.dtype)
    hi_ref[...] = (xu_ref[...] - yl_ref[...]).astype(hi_ref.dtype)


# ---------------------------------------------------------------------------
# Tiling plans
# ---------------------------------------------------------------------------

def _split_for_steps(tile, dim, other_steps, bytes_per_unit, multiple):
    """Shrink `tile` so the grid reaches >=_MIN_STEPS steps (DMA pipelining and
    multi-TensorCore sharding), but keep blocks >= ~1 MiB."""
    if dim <= multiple:
        return tile
    if other_steps * _cdiv(dim, tile) >= _MIN_STEPS:
        return tile
    want = _cdiv(_MIN_STEPS, max(1, other_steps))
    t_small = _round_up(_cdiv(dim, want), multiple)
    floor = _round_up(max(1, _cdiv(_MIN_BLOCK_BYTES, max(1, bytes_per_unit))),
                      multiple)
    return max(multiple, min(tile, max(t_small, floor)))


def _pick_lane_dim(out_shape, n):
    """Smallest suffix product >= 128 (keeps lanes modest, rows plentiful)."""
    p = 1
    for d in reversed(out_shape):
        p *= int(d)
        if p >= _LANES:
            return p
    return n if n > 0 else 1


def _plan_flat(out_shape, n, itemsize, tile_bytes):
    """Plan a lane-dense 2-D (R, L2) view with (tr, tc) blocks. No HBM copies:
    either a free flatten (n % 128 == 0) or a natural 2-D view with ragged
    last blocks masked by Pallas."""
    max_block_elems = max(_SUBLANES * _LANES, tile_bytes // itemsize)

    if n >= _LANES and n % _LANES == 0:
        C = None
        for cand in (2048, 1024, 512, 256, 128):          # widest lane-dense
            if n % cand == 0 and n // cand >= _SUBLANES:
                C = cand
                break
        if C is None:
            for cand in (128, 256, 512, 1024, 2048):      # maximize rows
                if n % cand == 0:
                    C = cand
                    break
        R, L2, tc = n // C, C, C
    else:
        # Ragged total: keep a natural trailing group as the lane axis and let
        # Pallas mask the ragged last blocks (no pad / no slice / no concat).
        L2 = _pick_lane_dim(out_shape, n)
        R = n // L2
        if L2 < _LANES:
            # TODO(synk): narrow (<128) lane output -> masked vst.msk stores.
            tc = L2
        else:
            tc = min(2048, _round_up(L2, _LANES))

    if R <= _SUBLANES:
        tr = R
    else:
        cap = max(_SUBLANES,
                  (max_block_elems // max(tc, 1)) // _SUBLANES * _SUBLANES)
        tr = min(cap, _round_up(R, _SUBLANES))
        tr = _split_for_steps(tr, R, _cdiv(L2, tc), tc * itemsize, _SUBLANES)
    return R, L2, tr, tc


# ---------------------------------------------------------------------------
# Flat (no-broadcast or scalar-operand) path; handles 1 or 2 outputs.
# ---------------------------------------------------------------------------

def _flat_pallas(kernel, inputs, out_dtypes, out_shape, tile_bytes):
    n = _prod(out_shape)
    itemsize = max([jnp.dtype(a.dtype).itemsize for a in inputs]
                   + [jnp.dtype(d).itemsize for d in out_dtypes])
    R, L2, tr, tc = _plan_flat(out_shape, n, itemsize, tile_bytes)
    grid = (_cdiv(R, tr), _cdiv(L2, tc))

    full_spec = pl.BlockSpec((tr, tc), lambda i, j: (i, j))
    scalar_spec = pl.BlockSpec((1, 1), lambda i, j: (0, 0))

    ops, in_specs, block_bytes = [], [], 0
    for a in inputs:
        if a.size == 1:
            ops.append(a.reshape(1, 1))
            in_specs.append(scalar_spec)
            block_bytes += jnp.dtype(a.dtype).itemsize
        else:
            ops.append(a.reshape(R, L2))
            in_specs.append(full_spec)
            block_bytes += tr * tc * jnp.dtype(a.dtype).itemsize

    out_structs = [jax.ShapeDtypeStruct((R, L2), d) for d in out_dtypes]
    out_specs = [pl.BlockSpec((tr, tc), lambda i, j: (i, j)) for _ in out_dtypes]
    block_bytes += sum(tr * tc * jnp.dtype(d).itemsize for d in out_dtypes)

    # Explicit VMEM budget: 2 pipeline buffers per streamed array + headroom.
    vmem_limit = int(min(_VMEM_LIMIT_CAP, 2 * block_bytes + (16 << 20)))

    bytes_acc = (sum(a.size * jnp.dtype(a.dtype).itemsize for a in inputs)
                 + sum(n * jnp.dtype(d).itemsize for d in out_dtypes))
    cost = pl.CostEstimate(flops=n * len(out_dtypes), transcendentals=0,
                           bytes_accessed=bytes_acc)

    multiple = len(out_dtypes) > 1
    outs = pl.pallas_call(
        kernel,
        out_shape=tuple(out_structs) if multiple else out_structs[0],
        grid_spec=pltpu.PrefetchScalarGridSpec(
            num_scalar_prefetch=0,
            grid=grid,
            in_specs=in_specs,
            out_specs=out_specs if multiple else out_specs[0]),
        compiler_params=pltpu.CompilerParams(
            dimension_semantics=("parallel", "parallel"),
            vmem_limit_bytes=vmem_limit),
        cost_estimate=cost,
    )(*ops)

    if multiple:
        return tuple(o.reshape(out_shape) for o in outs)
    return outs.reshape(out_shape)


# ---------------------------------------------------------------------------
# Broadcast (<=3 collapsed groups) path: in-kernel VPU broadcast, tunable ta.
# ---------------------------------------------------------------------------

def _sub_bcast(x, y, groups, out_shape, out_dtype, tile_bytes):
    oc = tuple(g[0] for g in groups)
    xc = tuple(g[0] if g[1] else 1 for g in groups)
    yc = tuple(g[0] if g[2] else 1 for g in groups)

    def pad3(s):
        return (1,) * (3 - len(s)) + tuple(s)

    oc3, xc3, yc3 = pad3(oc), pad3(xc), pad3(yc)
    A, B, C = oc3
    x3 = x.reshape(xc3)
    y3 = y.reshape(yc3)

    itemsize = max(jnp.dtype(d).itemsize for d in (x.dtype, y.dtype, out_dtype))
    max_block_elems = max(_SUBLANES * _LANES, tile_bytes // itemsize)

    # Lane tile (ragged last lane block is masked by Pallas).
    if C < _LANES:
        # TODO(synk): narrow (<128-lane) trailing group forces masked partial
        # stores; permuting a wide group to land last would avoid this.
        tc = C
    else:
        tc = min(2048, _round_up(C, _LANES))

    # Sublane tile (multiple of 8 or the full dim).
    if B <= _SUBLANES:
        tb = B
    else:
        cap_b = max(_SUBLANES,
                    (max_block_elems // max(tc, 1)) // _SUBLANES * _SUBLANES)
        tb = min(cap_b, _round_up(B, _SUBLANES))

    # Leading tile sized from the remaining per-buffer budget (was 1 before).
    ta = max(1, min(A, max_block_elems // max(1, tb * tc)))

    # Guarantee enough grid steps for DMA pipelining / multi-core sharding.
    ta = _split_for_steps(ta, A, _cdiv(B, tb) * _cdiv(C, tc),
                          tb * tc * itemsize, 1)
    tb = _split_for_steps(tb, B, _cdiv(A, ta) * _cdiv(C, tc),
                          ta * tc * itemsize, _SUBLANES)

    grid = (_cdiv(A, ta), _cdiv(B, tb), _cdiv(C, tc))

    def make_spec(shape3):
        a_f, b_f, c_f = shape3[0] == A, shape3[1] == B, shape3[2] == C
        block = (ta if a_f else 1, tb if b_f else 1, tc if c_f else 1)

        def idx(i, j, k, _a=a_f, _b=b_f, _c=c_f):
            return (i if _a else 0, j if _b else 0, k if _c else 0)

        return pl.BlockSpec(block, idx)

    def blk_bytes(shape3, dtype):
        a_f, b_f, c_f = shape3[0] == A, shape3[1] == B, shape3[2] == C
        return ((ta if a_f else 1) * (tb if b_f else 1) * (tc if c_f else 1)
                * jnp.dtype(dtype).itemsize)

    total_block = (blk_bytes(xc3, x.dtype) + blk_bytes(yc3, y.dtype)
                   + blk_bytes(oc3, out_dtype))
    vmem_limit = int(min(_VMEM_LIMIT_CAP, 2 * total_block + (16 << 20)))

    n_out = A * B * C
    bytes_acc = (x.size * jnp.dtype(x.dtype).itemsize
                 + y.size * jnp.dtype(y.dtype).itemsize
                 + n_out * jnp.dtype(out_dtype).itemsize)
    cost = pl.CostEstimate(flops=n_out, transcendentals=0,
                           bytes_accessed=bytes_acc)

    out3 = pl.pallas_call(
        _sub_kernel,
        out_shape=jax.ShapeDtypeStruct((A, B, C), out_dtype),
        grid_spec=pltpu.PrefetchScalarGridSpec(
            num_scalar_prefetch=0,
            grid=grid,
            in_specs=[make_spec(xc3), make_spec(yc3)],
            out_specs=make_spec(oc3)),
        compiler_params=pltpu.CompilerParams(
            dimension_semantics=("parallel", "parallel", "parallel"),
            vmem_limit_bytes=vmem_limit),
        cost_estimate=cost,
    )(x3, y3)

    return out3.reshape(out_shape)


# ---------------------------------------------------------------------------
# Public entry points
# ---------------------------------------------------------------------------

def _collapse_groups(out_shape, x_shape, y_shape):
    """Merge consecutive output axes with identical broadcast pattern; drop
    size-1 output axes. Each group: (size, x_is_full, y_is_full)."""
    r = len(out_shape)
    xs = (1,) * (r - len(x_shape)) + tuple(x_shape)
    ys = (1,) * (r - len(y_shape)) + tuple(y_shape)
    groups = []
    for o, xd, yd in zip(out_shape, xs, ys):
        if o == 1:
            continue
        xf, yf = xd == o, yd == o
        if groups and groups[-1][1] == xf and groups[-1][2] == yf:
            groups[-1][0] *= o
        else:
            groups.append([o, xf, yf])
    return [tuple(g) for g in groups]


def bound_sub_forward(x, y):
    """Pallas implementation of BoundSub.forward: broadcasted x - y."""
    x = jnp.asarray(x)
    y = jnp.asarray(y)
    out_shape = jnp.broadcast_shapes(x.shape, y.shape)
    out_dtype = jnp.result_type(x.dtype, y.dtype)

    n = _prod(out_shape)
    if n == 0:
        return jnp.zeros(out_shape, out_dtype)

    groups = _collapse_groups(out_shape, x.shape, y.shape)
    broadcasting = any((not g[1]) or (not g[2]) for g in groups)
    budget = _tile_budget_bytes()

    if (not broadcasting) or len(groups) <= 1:
        # Equal-shape subtract, or one operand is effectively a scalar:
        # flat lane-dense path (scalar rides along as a (1,1) block).
        return _flat_pallas(_sub_kernel, [x, y], [out_dtype], out_shape, budget)
    if len(groups) <= 3:
        return _sub_bcast(x, y, groups, out_shape, out_dtype, budget)
    # TODO(synk): >3 alternating broadcast groups (rare shape pattern) fall
    # back to materializing the broadcast in HBM before the flat kernel.
    xb = jnp.broadcast_to(x, out_shape)
    yb = jnp.broadcast_to(y, out_shape)
    return _flat_pallas(_sub_kernel, [xb, yb], [out_dtype], out_shape, budget)


def bound_sub_interval(x_lower, x_upper, y_lower, y_upper):
    """(x_L - y_U, x_U - y_L), fused into one Pallas call when shapes allow."""
    xL, xU = jnp.asarray(x_lower), jnp.asarray(x_upper)
    yL, yU = jnp.asarray(y_lower), jnp.asarray(y_upper)
    if xL.shape != xU.shape or yL.shape != yU.shape:
        return bound_sub_forward(xL, yU), bound_sub_forward(xU, yL)

    out_shape = jnp.broadcast_shapes(xL.shape, yL.shape)
    out_dtype = jnp.result_type(xL.dtype, xU.dtype, yL.dtype, yU.dtype)
    n = _prod(out_shape)
    if n == 0:
        z = jnp.zeros(out_shape, out_dtype)
        return z, z

    groups = _collapse_groups(out_shape, xL.shape, yL.shape)
    broadcasting = any((not g[1]) or (not g[2]) for g in groups)
    if (not broadcasting) or len(groups) <= 1:
        # One pallas_call, 4 inputs + 2 outputs sharing one DMA pipeline.
        # Halve the per-buffer budget: 6 streamed arrays instead of 3.
        budget = max(_SUBLANES * _LANES * 8, _tile_budget_bytes() // 2)
        lo, hi = _flat_pallas(_dual_sub_kernel, [xL, yU, xU, yL],
                              [out_dtype, out_dtype], out_shape, budget)
        return lo, hi
    # TODO(synk): fused broadcast interval kernel; fall back to two calls.
    return bound_sub_forward(xL, yU), bound_sub_forward(xU, yL)


class BoundSubPallas:
    """Minimal stand-in for auto_LiRPA BoundSub with a Pallas forward."""

    def __init__(self):
        self.x_shape = None
        self.y_shape = None

    def forward(self, x, y):
        self.x_shape = jnp.shape(x)
        self.y_shape = jnp.shape(y)
        return bound_sub_forward(x, y)

    def interval_propagate(self, x, y):
        # (x_L - y_U, x_U - y_L), fused into one kernel when possible.
        return bound_sub_interval(x[0], x[1], y[0], y[1])


if __name__ == "__main__":
    key = jax.random.PRNGKey(0)
    k1, k2, k3, k4, k5 = jax.random.split(key, 5)

    mod = BoundSubPallas()

    # NCHW activations, same-shape subtract (flat lane-dense path).
    x = jax.random.normal(k1, (2, 4, 16, 16), dtype=jnp.float32)
    y = jax.random.normal(k2, (2, 4, 16, 16), dtype=jnp.float32)
    out = jax.block_until_ready(mod.forward(x, y))
    assert out.shape == (2, 4, 16, 16)
    assert jnp.allclose(out, x - y, atol=1e-6, rtol=1e-6)

    # Bias-like broadcast over channels: in-kernel VPU broadcast path.
    b = jax.random.normal(k3, (1, 4, 1, 1), dtype=jnp.float32)
    out2 = jax.block_until_ready(mod.forward(x, b))
    assert out2.shape == (2, 4, 16, 16)
    assert jnp.allclose(out2, x - b, atol=1e-6, rtol=1e-6)

    # Scalar cases; subtraction order must be preserved.
    s = jnp.float32(0.5)
    out3 = jax.block_until_ready(mod.forward(x, s))
    assert jnp.allclose(out3, x - s, atol=1e-6, rtol=1e-6)
    out4 = jax.block_until_ready(mod.forward(s, x))
    assert jnp.allclose(out4, s - x, atol=1e-6, rtol=1e-6)

    # Ragged total (numel % 128 != 0): no pad / no slice path.
    xr = jax.random.normal(k4, (3, 5, 7), dtype=jnp.float32)
    yr = jax.random.normal(k5, (3, 5, 7), dtype=jnp.float32)
    out5 = jax.block_until_ready(mod.forward(xr, yr))
    assert jnp.allclose(out5, xr - yr, atol=1e-6, rtol=1e-6)

    # Fused interval propagation (single pallas_call, 4 in / 2 out).
    xL, xU = x - 0.1, x + 0.1
    yL, yU = y - 0.2, y + 0.2
    lo, hi = mod.interval_propagate((xL, xU), (yL, yU))
    jax.block_until_ready((lo, hi))
    assert jnp.allclose(lo, xL - yU, atol=1e-6, rtol=1e-6)
    assert jnp.allclose(hi, xU - yL, atol=1e-6, rtol=1e-6)

    print("KERNEL_OK")
</pallas_src>

<mosaic_0001>
module attributes {stable_mosaic.version = 11 : i64} {
  func.func @_sub_kernel(%arg0: i32, %arg1: i32, %arg2: memref<8x256xf32, #tpu.memory_space<vmem>>, %arg3: memref<8x256xf32, #tpu.memory_space<vmem>>, %arg4: memref<8x256xf32, #tpu.memory_space<vmem>>) attributes {dimension_semantics = [#tpu.dimension_semantics<parallel>, #tpu.dimension_semantics<parallel>], iteration_bounds = array<i64: 1, 1>, scalar_prefetch = 0 : i64, scratch_operands = 0 : i64, tpu.core_type = #tpu.core_type<tc>, window_params = [{transform_indices = @transform_0, window_bounds = array<i64: 8, 256>}, {transform_indices = @transform_1, window_bounds = array<i64: 8, 256>}, {transform_indices = @transform_2, window_bounds = array<i64: 8, 256>}]} {
    %c0 = arith.constant 0 : index
    %c0_0 = arith.constant 0 : index
    %0 = vector.load %arg2[%c0, %c0_0] : memref<8x256xf32, #tpu.memory_space<vmem>>, vector<8x256xf32>
    %c0_1 = arith.constant 0 : index
    %c0_2 = arith.constant 0 : index
    %1 = vector.load %arg3[%c0_1, %c0_2] : memref<8x256xf32, #tpu.memory_space<vmem>>, vector<8x256xf32>
    %2 = arith.subf %0, %1 : vector<8x256xf32>
    %c0_3 = arith.constant 0 : index
    %c0_4 = arith.constant 0 : index
    %3 = vector.load %arg4[%c0_3, %c0_4] : memref<8x256xf32, #tpu.memory_space<vmem>>, vector<8x256xf32>
    tpu.vector_store %arg4[%c0_3, %c0_4], %2 {strides = array<i32>} : memref<8x256xf32, #tpu.memory_space<vmem>>, vector<8x256xf32>,
    return
  }
  func.func @transform_0(%arg0: i32, %arg1: i32) -> (i32, i32) {
    %c0_i32 = arith.constant 0 : i32
    return %arg0, %arg1 : i32, i32
  }
  func.func @transform_1(%arg0: i32, %arg1: i32) -> (i32, i32) {
    %c0_i32 = arith.constant 0 : i32
    return %arg0, %arg1 : i32, i32
  }
  func.func @transform_2(%arg0: i32, %arg1: i32) -> (i32, i32) {
    %c0_i32 = arith.constant 0 : i32
    return %arg0, %arg1 : i32, i32
  }
}

</mosaic_0001>

<llo_original>
// kernel: tpu_custom_call.1
$region0: #{tpu_custom_call.1}
  #allocation0 [shape = 'u32[]', space=smem, size = 0x4, offset = 0x4, fixed_abs, tag = 'smem constant byte address 0x4 - core index']
  #allocation1 [shape = 'u32[144,128]{1,0:T(1,128)}', space=vmem, size = 0x12000, scoped, tag = 'internal scratch']
  %s0 = inlined_call_operand.hbm [shape: f32[8,256], index: 0, kind: input, shape index: {}]
  %s1 = inlined_call_operand.hbm [shape: f32[8,256], index: 1, kind: input, shape index: {}]
  %s2 = inlined_call_operand.hbm [shape: f32[8,256], index: 2, kind: output, shape index: {}]
  %s3 = sld [smem:[#allocation0]]
  $region26: #{tpu_custom_call.1} parent=0
    _
  %s5 = ssub.s32 1, %s3
  %s6 = scalar_select 0, %s5, %s3
  $region1: #{tpu_custom_call.1} parent=0
    #allocation2 [shape = 'u8[8192]{0}', space=vmem, size = 0x2000, scoped, tag = 'input window, operand 0, single buffered']
    #allocation3 [shape = 's32[1]{0}', space=sflag, size = 0x4, scoped, tag = 'scoped memory for tpu_custom_call.1']
    #allocation4 [shape = 's32[1]{0}', space=sflag, size = 0x4, scoped, tag = 'scoped memory for tpu_custom_call.1']
    #allocation5 [shape = 'u8[8192]{0}', space=vmem, size = 0x2000, scoped, tag = 'input window, operand 1, single buffered']
    #allocation6 [shape = 's32[1]{0}', space=sflag, size = 0x4, scoped, tag = 'scoped memory for tpu_custom_call.1']
    #allocation7 [shape = 'u8[8192]{0}', space=vmem, size = 0x2000, scoped, tag = 'output window, operand 0, single buffered']
    %7 = vsyncpa [#allocation3], 0
    %8 = vsyncpa [#allocation6], 0
    %9 = vsyncpa [#allocation4], 0
    // Predicated region
    $region2: #{tpu_custom_call.1} parent=1 // pred_check
      _
    $region3: #{tpu_custom_call.1} parent=1 // pred_check_branch
      %11 = sbr.rel (0) target = $region5
    $region4: #{tpu_custom_call.1} parent=1 // pred_region
      %s13 = ssub.s32 256, 256
      %14 = vsyncadd [#allocation3], %s13
      %s16 = sshll.u32 [#allocation2], 4
      %s17 = int_to_ptr.vmem [resolvable:$true] %s16
      %19 = dma.hbm_to_vmem [thread:$0]  %s0, 256, %s17, [#allocation3]
    $region5: #{tpu_custom_call.1} parent=1 // pred_fallthru
      _
    // Predicated region
    $region6: #{tpu_custom_call.1} parent=1 // pred_check
      _
    $region7: #{tpu_custom_call.1} parent=1 // pred_check_branch
      %21 = sbr.rel (0) target = $region9
    $region8: #{tpu_custom_call.1} parent=1 // pred_region
      %s23 = ssub.s32 256, 256
      %24 = vsyncadd [#allocation6], %s23
      %s26 = sshll.u32 [#allocation5], 4
      %s27 = int_to_ptr.vmem [resolvable:$true] %s26
      %29 = dma.hbm_to_vmem [thread:$0]  %s1, 256, %s27, [#allocation6]
    $region9: #{tpu_custom_call.1} parent=1 // pred_fallthru
      _
    // Predicated region
    $region10: #{tpu_custom_call.1} parent=1 // pred_check
      _
    $region11: #{tpu_custom_call.1} parent=1 // pred_check_branch
      %31 = sbr.rel (0) target = $region13
    $region12: #{tpu_custom_call.1} parent=1 // pred_region
      %32 = dma.done [#allocation3], 256
    $region13: #{tpu_custom_call.1} parent=1 // pred_fallthru
      _
    // Predicated region
    $region14: #{tpu_custom_call.1} parent=1 // pred_check
      _
    $region15: #{tpu_custom_call.1} parent=1 // pred_check_branch
      %34 = sbr.rel (0) target = $region17
    $region16: #{tpu_custom_call.1} parent=1 // pred_region
      %35 = dma.done [#allocation6], 256
    $region17: #{tpu_custom_call.1} parent=1 // pred_fallthru
      _
    %v36 = vld [vmem:[#allocation2] sm:$0xff]
    %v37 = vld [vmem:[#allocation2 + $0x8] sm:$0xff]
    %v38 = vld [vmem:[#allocation5] sm:$0xff]
    %v39 = vld [vmem:[#allocation5 + $0x8] sm:$0xff]
    %v40 = vsub.f32 %v36, %v38
    %v41 = vsub.f32 %v37, %v39
    %42 = vst [vmem:[#allocation7] sm:$0xff] %v40
    %43 = vst [vmem:[#allocation7 + $0x8] sm:$0xff] %v41
    // Predicated region
    $region18: #{tpu_custom_call.1} parent=1 // pred_check
      _
    $region19: #{tpu_custom_call.1} parent=1 // pred_check_branch
      %45 = sbr.rel (0) target = $region21
    $region20: #{tpu_custom_call.1} parent=1 // pred_region
      %s47 = ssub.s32 256, 256
      %48 = vsyncadd [#allocation4], %s47
      %s50 = sshll.u32 [#allocation7], 4
      %s51 = int_to_ptr.vmem [resolvable:$true] %s50
      %53 = dma.vmem_to_hbm [thread:$0]  %s51, 256, %s2, [#allocation4]
    $region21: #{tpu_custom_call.1} parent=1 // pred_fallthru
      _
    // Predicated region
    $region22: #{tpu_custom_call.1} parent=1 // pred_check
      _
    $region23: #{tpu_custom_call.1} parent=1 // pred_check_branch
      %55 = sbr.rel (0) target = $region25
    $region24: #{tpu_custom_call.1} parent=1 // pred_region
      %56 = dma.done [#allocation4], 256
    $region25: #{tpu_custom_call.1} parent=1 // pred_fallthru
      _
    %57 = vsyncpa [#allocation3], 1
    %58 = vsyncpa [#allocation6], 1
    %59 = vsyncpa [#allocation4], 1

</llo_original>
